<compile_context>
chip_gen: v7x
topology: tpu7x:2x2x1
jax: 0.10.0
libtpu: 0.0.40
codegen_flags: <defaults>
</compile_context>

<pallas_src>
import jax
import jax.numpy as jnp
from jax.experimental import pallas as pl
from jax.experimental.pallas import tpu as pltpu


def _round_up(n, m):
    return ((n + m - 1) // m) * m


def _cdiv(a, b):
    return (a + b - 1) // b


# Conservative scoped-VMEM budget that fits every generation (v7x: 64 MiB/TC).
_VMEM_BUDGET = 48 * 1024 * 1024


def _vmem_bytes(tm, in_p, out_p, c_p, op_bytes):
    """Approximate kernel VMEM footprint for a batch tile of tm rows."""
    weights = (in_p * out_p + out_p * c_p) * op_bytes   # Buffered(1): one copy
    biases = (out_p + c_p) * 4                          # f32, Buffered(1)
    x_buf = 2 * tm * in_p * op_bytes                    # double-buffered input tile
    o_buf = 2 * tm * c_p * 4                            # double-buffered output tile
    temps = tm * (3 * out_p + 2 * c_p) * 4              # h / h1 / z f32 temporaries
    return weights + biases + x_buf + o_buf + temps


def _projdeci_kernel(x_ref, w1_ref, b1_ref, w2_ref, b2_ref, out_ref):
    # eps^2: max(sqrt(s), 1e-12) == sqrt(max(s, 1e-24))
    eps_sq = jnp.float32(1e-24)

    x = x_ref[...]                                          # [tm, in_p]
    compute_dtype = x.dtype

    # ---- fc1 + relu (MXU, f32 accumulation) ----
    h = jnp.dot(x, w1_ref[...], preferred_element_type=jnp.float32)
    h = jnp.maximum(h + b1_ref[...], 0.0)                   # b1 is [1, out_p]

    # ---- L2 normalize along dim=1 via rsqrt (EUP) + multiply ----
    ssq1 = jnp.sum(h * h, axis=1, keepdims=True)
    h1 = h * jax.lax.rsqrt(jnp.maximum(ssq1, eps_sq))

    # ---- fc2 + relu ----
    z = jnp.dot(h1.astype(compute_dtype), w2_ref[...],
                preferred_element_type=jnp.float32)
    z = jnp.maximum(z + b2_ref[...], 0.0)                   # b2 is [1, c_p]

    # ---- L2 normalize along dim=1 ----
    ssq2 = jnp.sum(z * z, axis=1, keepdims=True)
    out_ref[...] = (z * jax.lax.rsqrt(jnp.maximum(ssq2, eps_sq))).astype(out_ref.dtype)


def prepare_projdeci_params(w1, b1, w2, b2, *, compute_dtype=jnp.bfloat16):
    """Pad / cast weights once (hoisted out of the per-call path).

    w1: [in_d, out_d] (== PyTorch fc1.weight transposed), b1: [out_d]
    w2: [out_d, num_classes] (== fc2.weight transposed),  b2: [num_classes]
    """
    in_d, out_d = w1.shape
    out_d2, num_classes = w2.shape
    assert out_d == out_d2 and b1.shape == (out_d,) and b2.shape == (num_classes,)

    in_p = _round_up(in_d, 128)
    out_p = _round_up(out_d, 128)
    c_p = _round_up(num_classes, 128)
    f32 = jnp.float32

    if (in_d, out_d) == (in_p, out_p):
        w1_p = w1.astype(compute_dtype)
    else:
        w1_p = jnp.zeros((in_p, out_p), compute_dtype).at[:in_d, :out_d].set(
            w1.astype(compute_dtype))
    if (out_d, num_classes) == (out_p, c_p):
        w2_p = w2.astype(compute_dtype)
    else:
        w2_p = jnp.zeros((out_p, c_p), compute_dtype).at[:out_d, :num_classes].set(
            w2.astype(compute_dtype))

    b1_p = jnp.zeros((1, out_p), f32).at[0, :out_d].set(b1.astype(f32))
    b2_p = jnp.zeros((1, c_p), f32).at[0, :num_classes].set(b2.astype(f32))

    return {
        "w1": w1_p, "b1": b1_p, "w2": w2_p, "b2": b2_p,
        "dims": (in_d, out_d, num_classes),
        "compute_dtype": compute_dtype,
    }


def projanddeci_norm_prepared(x, params, *, tile_m=1024):
    """Fused forward pass with pre-padded params. x: [B, in_d] f32 (or bf16)."""
    w1_p, b1_p, w2_p, b2_p = params["w1"], params["b1"], params["w2"], params["b2"]
    in_d, out_d, num_classes = params["dims"]
    compute_dtype = params["compute_dtype"]
    in_p, out_p = w1_p.shape
    c_p = w2_p.shape[1]
    op_bytes = jnp.dtype(compute_dtype).itemsize

    B = x.shape[0]
    assert x.shape[1] == in_d

    # --- balanced batch tiling; force >=2 tiles when B permits so v7x's two
    #     TensorCores both get work via dimension_semantics=("parallel",). ---
    n_tiles = max(_cdiv(B, tile_m), 2 if B >= 16 else 1)
    tm = _round_up(_cdiv(B, n_tiles), 8)
    # Shrink tiles until the footprint fits the conservative VMEM budget.
    while tm > 8 and _vmem_bytes(tm, in_p, out_p, c_p, op_bytes) > _VMEM_BUDGET:
        n_tiles += 1
        tm = _round_up(_cdiv(B, n_tiles), 8)
    b_p = n_tiles * tm
    # TODO(synk): if the padded weights alone exceed the VMEM budget, a K-split
    # grid axis over in_p with an accumulator scratch would be needed.

    # --- x: pad / cast only when actually required (avoid extra HBM copies). ---
    if b_p == B and in_p == in_d:
        x_p = x if x.dtype == compute_dtype else x.astype(compute_dtype)
    else:
        x_p = jnp.zeros((b_p, in_p), compute_dtype).at[:B, :in_d].set(
            x.astype(compute_dtype))

    footprint = _vmem_bytes(tm, in_p, out_p, c_p, op_bytes)
    vmem_limit = int(min(max(footprint * 5 // 4, 16 << 20), 56 << 20))

    cost = pl.CostEstimate(
        flops=2 * b_p * (in_p * out_p + out_p * c_p),
        transcendentals=2 * b_p,
        bytes_accessed=(b_p * in_p * op_bytes
                        + (in_p * out_p + out_p * c_p) * op_bytes
                        + (out_p + c_p) * 4
                        + b_p * c_p * 4),
    )

    y_full = pl.pallas_call(
        _projdeci_kernel,
        out_shape=jax.ShapeDtypeStruct((b_p, c_p), jnp.float32),
        grid=(n_tiles,),
        in_specs=[
            # x: streamed batch tiles (default double-buffered pipeline).
            pl.BlockSpec((tm, in_p), lambda i: (i, 0)),
            # Weights / biases: constant index_map + single buffer -> fetched
            # once, VMEM-resident, half the default weight footprint.
            pl.BlockSpec((in_p, out_p), lambda i: (0, 0),
                         pipeline_mode=pl.Buffered(1)),
            pl.BlockSpec((1, out_p), lambda i: (0, 0),
                         pipeline_mode=pl.Buffered(1)),
            pl.BlockSpec((out_p, c_p), lambda i: (0, 0),
                         pipeline_mode=pl.Buffered(1)),
            pl.BlockSpec((1, c_p), lambda i: (0, 0),
                         pipeline_mode=pl.Buffered(1)),
        ],
        out_specs=pl.BlockSpec((tm, c_p), lambda i: (i, 0)),
        compiler_params=pltpu.CompilerParams(
            dimension_semantics=("parallel",),   # shard batch tiles across TCs
            vmem_limit_bytes=vmem_limit,
        ),
        cost_estimate=cost,
    )(x_p, w1_p, b1_p, w2_p, b2_p)

    if b_p == B and c_p == num_classes:
        return y_full
    return y_full[:B, :num_classes]


def projanddeci_norm(x, w1, b1, w2, b2, *, compute_dtype=jnp.bfloat16, tile_m=1024):
    """One-shot convenience wrapper (pads weights on every call; prefer
    prepare_projdeci_params + projanddeci_norm_prepared for repeated use)."""
    params = prepare_projdeci_params(w1, b1, w2, b2, compute_dtype=compute_dtype)
    return projanddeci_norm_prepared(x, params, tile_m=tile_m)


def _init_linear(key, fan_in, fan_out):
    # Deterministic init mimicking nn.Linear's uniform(-1/sqrt(fan_in), 1/sqrt(fan_in)).
    kw, kb = jax.random.split(key)
    bound = 1.0 / jnp.sqrt(jnp.float32(fan_in))
    # Stored as [fan_in, fan_out] == W^T of the PyTorch [fan_out, fan_in] weight.
    w = jax.random.uniform(kw, (fan_in, fan_out), jnp.float32, -bound, bound)
    b = jax.random.uniform(kb, (fan_out,), jnp.float32, -bound, bound)
    return w, b


if __name__ == "__main__":
    key = jax.random.PRNGKey(0)
    k_x, k_fc1, k_fc2 = jax.random.split(key, 3)

    # Small shapes consistent with the module: x is [batch, in_d].
    B, in_d, out_d, num_classes = 8, 32, 64, 16

    x = jax.random.normal(k_x, (B, in_d), jnp.float32)
    w1, b1 = _init_linear(k_fc1, in_d, out_d)
    w2, b2 = _init_linear(k_fc2, out_d, num_classes)

    # Pure-JAX reference (exact PyTorch semantics).
    def ref(x):
        h = jnp.maximum(x @ w1 + b1, 0.0)
        h = h / jnp.maximum(jnp.linalg.norm(h, axis=1, keepdims=True), 1e-12)
        z = jnp.maximum(h @ w2 + b2, 0.0)
        return z / jnp.maximum(jnp.linalg.norm(z, axis=1, keepdims=True), 1e-12)

    y_ref = ref(x)

    # Exact-semantics path: f32 matmul operands, tight tolerance.
    params_f32 = prepare_projdeci_params(w1, b1, w2, b2, compute_dtype=jnp.float32)
    y32 = jax.block_until_ready(projanddeci_norm_prepared(x, params_f32))
    assert y32.shape == (B, num_classes)
    assert jnp.allclose(y32, y_ref, atol=1e-5, rtol=1e-5)

    # Default fast path: bf16 matmul operands, f32 accumulation + f32 epilogue.
    params_bf16 = prepare_projdeci_params(w1, b1, w2, b2, compute_dtype=jnp.bfloat16)
    ybf = jax.block_until_ready(projanddeci_norm_prepared(x, params_bf16))
    assert ybf.shape == (B, num_classes)
    assert jnp.allclose(ybf, y_ref, atol=3e-2, rtol=3e-2)

    print("KERNEL_OK")
</pallas_src>

<mosaic_0001>
module attributes {stable_mosaic.version = 11 : i64} {
  func.func @_projdeci_kernel(%arg0: i32, %arg1: memref<8x128xf32, #tpu.memory_space<vmem>>, %arg2: memref<128x128xf32, #tpu.memory_space<vmem>>, %arg3: memref<1x128xf32, #tpu.memory_space<vmem>>, %arg4: memref<128x128xf32, #tpu.memory_space<vmem>>, %arg5: memref<1x128xf32, #tpu.memory_space<vmem>>, %arg6: memref<8x128xf32, #tpu.memory_space<vmem>>) attributes {dimension_semantics = [#tpu.dimension_semantics<parallel>], iteration_bounds = array<i64: 1>, scalar_prefetch = 0 : i64, scratch_operands = 0 : i64, tpu.core_type = #tpu.core_type<tc>, window_params = [{transform_indices = @transform_0, window_bounds = array<i64: 8, 128>}, {pipeline_mode = #tpu.pipeline_mode<synchronous>, transform_indices = @transform_1, window_bounds = array<i64: 128, 128>}, {pipeline_mode = #tpu.pipeline_mode<synchronous>, transform_indices = @transform_2, window_bounds = array<i64: 1, 128>}, {pipeline_mode = #tpu.pipeline_mode<synchronous>, transform_indices = @transform_3, window_bounds = array<i64: 128, 128>}, {pipeline_mode = #tpu.pipeline_mode<synchronous>, transform_indices = @transform_4, window_bounds = array<i64: 1, 128>}, {transform_indices = @transform_5, window_bounds = array<i64: 8, 128>}]} {
    %c0 = arith.constant 0 : index
    %c0_0 = arith.constant 0 : index
    %0 = vector.load %arg1[%c0, %c0_0] : memref<8x128xf32, #tpu.memory_space<vmem>>, vector<8x128xf32>
    %c0_1 = arith.constant 0 : index
    %c0_2 = arith.constant 0 : index
    %1 = vector.load %arg2[%c0_1, %c0_2] : memref<128x128xf32, #tpu.memory_space<vmem>>, vector<128x128xf32>
    %cst = arith.constant dense<0.000000e+00> : vector<8x128xf32>
    %2 = tpu.matmul %0, %1, %cst {dimension_numbers = #tpu.dot_dimension_numbers<[1], [0], [0], [1], [0, 0, 1, 1], [], []>} : vector<8x128xf32>, vector<128x128xf32>, vector<8x128xf32> -> vector<8x128xf32>
    %c0_3 = arith.constant 0 : index
    %c0_4 = arith.constant 0 : index
    %3 = vector.load %arg3[%c0_3, %c0_4] : memref<1x128xf32, #tpu.memory_space<vmem>>, vector<1x128xf32>
    %4 = vector.broadcast %3 : vector<1x128xf32> to vector<8x128xf32>
    %5 = arith.addf %2, %4 : vector<8x128xf32>
    %cst_5 = arith.constant 0.000000e+00 : f32
    %6 = vector.broadcast %cst_5 : f32 to vector<8x128xf32>
    %7 = arith.maximumf %5, %6 : vector<8x128xf32>
    %8 = arith.mulf %7, %7 : vector<8x128xf32>
    %cst_6 = arith.constant dense<0.000000e+00> : vector<8xf32>
    %9 = vector.multi_reduction <add>, %8, %cst_6 [1] : vector<8x128xf32> to vector<8xf32>
    %10 = vector.shape_cast %9 : vector<8xf32> to vector<8x1xf32>
    %cst_7 = arith.constant 1.000000e-24 : f32
    %11 = vector.broadcast %cst_7 : f32 to vector<8x1xf32>
    %12 = arith.maximumf %10, %11 : vector<8x1xf32>
    %13 = math.rsqrt %12 : vector<8x1xf32>
    %14 = vector.broadcast %13 : vector<8x1xf32> to vector<8x128xf32>
    %15 = arith.mulf %7, %14 : vector<8x128xf32>
    %c0_8 = arith.constant 0 : index
    %c0_9 = arith.constant 0 : index
    %16 = vector.load %arg4[%c0_8, %c0_9] : memref<128x128xf32, #tpu.memory_space<vmem>>, vector<128x128xf32>
    %cst_10 = arith.constant dense<0.000000e+00> : vector<8x128xf32>
    %17 = tpu.matmul %15, %16, %cst_10 {dimension_numbers = #tpu.dot_dimension_numbers<[1], [0], [0], [1], [0, 0, 1, 1], [], []>} : vector<8x128xf32>, vector<128x128xf32>, vector<8x128xf32> -> vector<8x128xf32>
    %c0_11 = arith.constant 0 : index
    %c0_12 = arith.constant 0 : index
    %18 = vector.load %arg5[%c0_11, %c0_12] : memref<1x128xf32, #tpu.memory_space<vmem>>, vector<1x128xf32>
    %19 = vector.broadcast %18 : vector<1x128xf32> to vector<8x128xf32>
    %20 = arith.addf %17, %19 : vector<8x128xf32>
    %cst_13 = arith.constant 0.000000e+00 : f32
    %21 = vector.broadcast %cst_13 : f32 to vector<8x128xf32>
    %22 = arith.maximumf %20, %21 : vector<8x128xf32>
    %23 = arith.mulf %22, %22 : vector<8x128xf32>
    %cst_14 = arith.constant dense<0.000000e+00> : vector<8xf32>
    %24 = vector.multi_reduction <add>, %23, %cst_14 [1] : vector<8x128xf32> to vector<8xf32>
    %25 = vector.shape_cast %24 : vector<8xf32> to vector<8x1xf32>
    %cst_15 = arith.constant 1.000000e-24 : f32
    %26 = vector.broadcast %cst_15 : f32 to vector<8x1xf32>
    %27 = arith.maximumf %25, %26 : vector<8x1xf32>
    %28 = math.rsqrt %27 : vector<8x1xf32>
    %29 = vector.broadcast %28 : vector<8x1xf32> to vector<8x128xf32>
    %30 = arith.mulf %22, %29 : vector<8x128xf32>
    %c0_16 = arith.constant 0 : index
    %c0_17 = arith.constant 0 : index
    %31 = vector.load %arg6[%c0_16, %c0_17] : memref<8x128xf32, #tpu.memory_space<vmem>>, vector<8x128xf32>
    tpu.vector_store %arg6[%c0_16, %c0_17], %30 {strides = array<i32>} : memref<8x128xf32, #tpu.memory_space<vmem>>, vector<8x128xf32>,
    return
  }
  func.func @transform_0(%arg0: i32) -> (i32, i32) {
    %c0_i32 = arith.constant 0 : i32
    %c0_i32_0 = arith.constant 0 : i32
    return %arg0, %c0_i32 : i32, i32
  }
  func.func @transform_1(%arg0: i32) -> (i32, i32) {
    %c0_i32 = arith.constant 0 : i32
    %c0_i32_0 = arith.constant 0 : i32
    %c0_i32_1 = arith.constant 0 : i32
    return %c0_i32, %c0_i32_0 : i32, i32
  }
  func.func @transform_2(%arg0: i32) -> (i32, i32) {
    %c0_i32 = arith.constant 0 : i32
    %c0_i32_0 = arith.constant 0 : i32
    %c0_i32_1 = arith.constant 0 : i32
    return %c0_i32, %c0_i32_0 : i32, i32
  }
  func.func @transform_3(%arg0: i32) -> (i32, i32) {
    %c0_i32 = arith.constant 0 : i32
    %c0_i32_0 = arith.constant 0 : i32
    %c0_i32_1 = arith.constant 0 : i32
    return %c0_i32, %c0_i32_0 : i32, i32
  }
  func.func @transform_4(%arg0: i32) -> (i32, i32) {
    %c0_i32 = arith.constant 0 : i32
    %c0_i32_0 = arith.constant 0 : i32
    %c0_i32_1 = arith.constant 0 : i32
    return %c0_i32, %c0_i32_0 : i32, i32
  }
  func.func @transform_5(%arg0: i32) -> (i32, i32) {
    %c0_i32 = arith.constant 0 : i32
    %c0_i32_0 = arith.constant 0 : i32
    return %arg0, %c0_i32 : i32, i32
  }
}

</mosaic_0001>

<llo_original>
// kernel: tpu_custom_call.1
$region0: #{tpu_custom_call.1}
  #allocation0 [shape = 'u32[]', space=smem, size = 0x4, offset = 0x4, fixed_abs, tag = 'smem constant byte address 0x4 - core index']
  #allocation1 [shape = 'u32[144,128]{1,0:T(1,128)}', space=vmem, size = 0x12000, scoped, tag = 'internal scratch']
  %s0 = inlined_call_operand.hbm [shape: f32[8,128], index: 0, kind: input, shape index: {}]
  %s1 = inlined_call_operand.hbm [shape: f32[128,128], index: 1, kind: input, shape index: {}]
  %s2 = inlined_call_operand.vmem [shape: f32[1,128], index: 2, kind: input, shape index: {}]
  %s3 = inlined_call_operand.hbm [shape: f32[128,128], index: 3, kind: input, shape index: {}]
  %s4 = inlined_call_operand.vmem [shape: f32[1,128], index: 4, kind: input, shape index: {}]
  %s5 = inlined_call_operand.hbm [shape: f32[8,128], index: 5, kind: output, shape index: {}]
  %s6 = sld [smem:[#allocation0]]
  $region42: #{tpu_custom_call.1} parent=0
    _
  %s8 = ssub.s32 1, %s6
  %s9 = scalar_select 0, %s8, %s6
  $region1: #{tpu_custom_call.1} parent=0
    #allocation2 [shape = 'u8[4096]{0}', space=vmem, size = 0x1000, scoped, tag = 'input window, operand 0, single buffered']
    #allocation3 [shape = 's32[1]{0}', space=sflag, size = 0x4, scoped, tag = 'scoped memory for tpu_custom_call.1']
    #allocation4 [shape = 's32[1]{0}', space=sflag, size = 0x4, scoped, tag = 'scoped memory for tpu_custom_call.1']
    #allocation5 [shape = 'u8[65536]{0}', space=vmem, size = 0x10000, scoped, tag = 'input window, operand 1, single buffered']
    #allocation6 [shape = 's32[1]{0}', space=sflag, size = 0x4, scoped, tag = 'scoped memory for tpu_custom_call.1']
    #allocation7 [shape = 'u8[65536]{0}', space=vmem, size = 0x10000, scoped, tag = 'input window, operand 3, single buffered']
    #allocation8 [shape = 'u8[4096]{0}', space=vmem, size = 0x1000, scoped, tag = 'output window, operand 0, single buffered']
    %10 = vsyncpa [#allocation3], 0
    %11 = vsyncpa [#allocation6], 0
    %12 = vsyncpa [#allocation4], 0
    // Predicated region
    $region2: #{tpu_custom_call.1} parent=1 // pred_check
      _
    $region3: #{tpu_custom_call.1} parent=1 // pred_check_branch
      %14 = sbr.rel (0) target = $region5
    $region4: #{tpu_custom_call.1} parent=1 // pred_region
      %s16 = ssub.s32 128, 128
      %17 = vsyncadd [#allocation3], %s16
      %s19 = sshll.u32 [#allocation2], 4
      %s20 = int_to_ptr.vmem [resolvable:$true] %s19
      %22 = dma.hbm_to_vmem [thread:$0]  %s0, 128, %s20, [#allocation3]
    $region5: #{tpu_custom_call.1} parent=1 // pred_fallthru
      _
    // Predicated region
    $region6: #{tpu_custom_call.1} parent=1 // pred_check
      _
    $region7: #{tpu_custom_call.1} parent=1 // pred_check_branch
      %24 = sbr.rel (0) target = $region9
    $region8: #{tpu_custom_call.1} parent=1 // pred_region
      %s26 = ssub.s32 2048, 2048
      %27 = vsyncadd [#allocation6], %s26
      %s28 = sshll.u32 [#allocation5], 4
      %s29 = int_to_ptr.vmem [resolvable:$true] %s28
      %34 = dma.hbm_to_vmem [thread:$0]  %s1, 2048, %s29, [#allocation6], 128, 128, 8
    $region9: #{tpu_custom_call.1} parent=1 // pred_fallthru
      _
    // Predicated region
    $region10: #{tpu_custom_call.1} parent=1 // pred_check
      _
    $region11: #{tpu_custom_call.1} parent=1 // pred_check_branch
      %36 = sbr.rel (0) target = $region13
    $region12: #{tpu_custom_call.1} parent=1 // pred_region
      _
    $region13: #{tpu_custom_call.1} parent=1 // pred_fallthru
      _
    // Predicated region
    $region14: #{tpu_custom_call.1} parent=1 // pred_check
      _
    $region15: #{tpu_custom_call.1} parent=1 // pred_check_branch
      %38 = sbr.rel (0) target = $region17
    $region16: #{tpu_custom_call.1} parent=1 // pred_region
      %s40 = ssub.s32 2048, 2048
      %41 = vsyncadd [#allocation6], %s40
      %s42 = sshll.u32 [#allocation7], 4
      %s43 = int_to_ptr.vmem [resolvable:$true] %s42
      %48 = dma.hbm_to_vmem [thread:$0]  %s3, 2048, %s43, [#allocation6], 128, 128, 8
    $region17: #{tpu_custom_call.1} parent=1 // pred_fallthru
      _
    // Predicated region
    $region18: #{tpu_custom_call.1} parent=1 // pred_check
      _
    $region19: #{tpu_custom_call.1} parent=1 // pred_check_branch
      %50 = sbr.rel (0) target = $region21
    $region20: #{tpu_custom_call.1} parent=1 // pred_region
      _
    $region21: #{tpu_custom_call.1} parent=1 // pred_fallthru
      _
    // Predicated region
    $region22: #{tpu_custom_call.1} parent=1 // pred_check
      _
    $region23: #{tpu_custom_call.1} parent=1 // pred_check_branch
      %52 = sbr.rel (0) target = $region25
    $region24: #{tpu_custom_call.1} parent=1 // pred_region
      %53 = dma.done [#allocation3], 128
    $region25: #{tpu_custom_call.1} parent=1 // pred_fallthru
      _
    // Predicated region
    $region26: #{tpu_custom_call.1} parent=1 // pred_check
      _
    $region27: #{tpu_custom_call.1} parent=1 // pred_check_branch
      %55 = sbr.rel (0) target = $region29
    $region28: #{tpu_custom_call.1} parent=1 // pred_region
      %56 = dma.done [#allocation6], 2048
    $region29: #{tpu_custom_call.1} parent=1 // pred_fallthru
      _
    // Predicated region
    $region30: #{tpu_custom_call.1} parent=1 // pred_check
      _
    $region31: #{tpu_custom_call.1} parent=1 // pred_check_branch
      %58 = sbr.rel (0) target = $region33
    $region32: #{tpu_custom_call.1} parent=1 // pred_region
      %59 = dma.done [#allocation6], 2048
    $region33: #{tpu_custom_call.1} parent=1 // pred_fallthru
      _
    %v60 = vld [vmem:[#allocation2] sm:$0xff]
    %v61 = vld [vmem:[#allocation5] sm:$0xff]
    %v62 = vld [vmem:[#allocation5 + $0x8] sm:$0xff]
    %v63 = vld [vmem:[#allocation5 + $0x10] sm:$0xff]
    %v64 = vld [vmem:[#allocation5 + $0x18] sm:$0xff]
    %v65 = vld [vmem:[#allocation5 + $0x20] sm:$0xff]
    %v66 = vld [vmem:[#allocation5 + $0x28] sm:$0xff]
    %v67 = vld [vmem:[#allocation5 + $0x30] sm:$0xff]
    %v68 = vld [vmem:[#allocation5 + $0x38] sm:$0xff]
    %v69 = vld [vmem:[#allocation5 + $0x40] sm:$0xff]
    %v70 = vld [vmem:[#allocation5 + $0x48] sm:$0xff]
    %v71 = vld [vmem:[#allocation5 + $0x50] sm:$0xff]
    %v72 = vld [vmem:[#allocation5 + $0x58] sm:$0xff]
    %v73 = vld [vmem:[#allocation5 + $0x60] sm:$0xff]
    %v74 = vld [vmem:[#allocation5 + $0x68] sm:$0xff]
    %v75 = vld [vmem:[#allocation5 + $0x70] sm:$0xff]
    %v76 = vld [vmem:[#allocation5 + $0x78] sm:$0xff]
    %v77 = vld [vmem:[%s2] sm:$0x1]
    %v79 = vlaneseq
    %v80 = vshrl.u32 %v79, 7
    %v81 = vsub.s32 0, %v80
    %v82 = vrot.slane %v77, %v81
    %84 = vmatprep.subr.mxu0 0.0
    %85 = vmatpush1.msra.mxu0 %v61
    %86 = vmatprep.subr.mxu0 0.0
    %87 = vmatpush1.msra.mxu0 %v62
    %88 = vmatprep.subr.mxu0 0.0
    %89 = vmatpush1.msra.mxu0 %v63
    %90 = vmatprep.subr.mxu0 0.0
    %91 = vmatpush1.msra.mxu0 %v64
    %92 = vmatprep.subr.mxu0 0.0
    %93 = vmatpush1.msra.mxu0 %v65
    %94 = vmatprep.subr.mxu0 0.0
    %95 = vmatpush1.msra.mxu0 %v66
    %96 = vmatprep.subr.mxu0 0.0
    %97 = vmatpush1.msra.mxu0 %v67
    %98 = vmatprep.subr.mxu0 0.0
    %99 = vmatpush1.msra.mxu0 %v68
    %100 = vmatprep.subr.mxu0 0.0
    %101 = vmatpush1.msra.mxu0 %v69
    %102 = vmatprep.subr.mxu0 0.0
    %103 = vmatpush1.msra.mxu0 %v70
    %104 = vmatprep.subr.mxu0 0.0
    %105 = vmatpush1.msra.mxu0 %v71
    %106 = vmatprep.subr.mxu0 0.0
    %107 = vmatpush1.msra.mxu0 %v72
    %108 = vmatprep.subr.mxu0 0.0
    %109 = vmatpush1.msra.mxu0 %v73
    %110 = vmatprep.subr.mxu0 0.0
    %111 = vmatpush1.msra.mxu0 %v74
    %112 = vmatprep.subr.mxu0 0.0
    %113 = vmatpush1.msra.mxu0 %v75
    %114 = vmatprep.subr.mxu0 0.0
    %115 = vmatpush1.msra.mxu0 %v76
    %116 = vmatprep.subr.mxu0 0.0
    %117 = vmatpush1.msra.mxu0 0.0
    %118 = vmatprep.subr.mxu0 0.0
    %119 = vmatpush1.msra.mxu0 0.0
    %120 = vmatprep.subr.mxu0 0.0
    %121 = vmatpush1.msra.mxu0 0.0
    %122 = vmatprep.subr.mxu0 0.0
    %123 = vmatpush1.msra.mxu0 0.0
    %124 = vmatprep.subr.mxu0 0.0
    %125 = vmatpush1.msra.mxu0 0.0
    %126 = vmatprep.subr.mxu0 0.0
    %127 = vmatpush1.msra.mxu0 0.0
    %128 = vmatprep.subr.mxu0 0.0
    %129 = vmatpush1.msra.mxu0 0.0
    %130 = vmatprep.subr.mxu0 0.0
    %131 = vmatpush1.msra.mxu0 0.0
    %132 = vmatprep.subr.mxu0 0.0
    %133 = vmatpush1.msra.mxu0 0.0
    %134 = vmatprep.subr.mxu0 0.0
    %135 = vmatpush1.msra.mxu0 0.0
    %136 = vmatprep.subr.mxu0 0.0
    %137 = vmatpush1.msra.mxu0 0.0
    %138 = vmatprep.subr.mxu0 0.0
    %139 = vmatpush1.msra.mxu0 0.0
    %140 = vmatprep.subr.mxu0 0.0
    %141 = vmatpush1.msra.mxu0 0.0
    %142 = vmatprep.subr.mxu0 0.0
    %143 = vmatpush1.msra.mxu0 0.0
    %144 = vmatprep.subr.mxu0 0.0
    %145 = vmatpush1.msra.mxu0 0.0
    %146 = vmatprep.subr.mxu0 0.0
    %147 = vmatpush1.msra.mxu0 0.0
    %148 = vmatprep.mubr.f32.mxu0 0.0
    %149 = vmatmul.mubr.f32.gmra.mrb[0].mxu0 %v60
    %v150 = vpop.f32.mrb[0].mxu0
    %v151 = vadd.f32 %v82, %v150
    %v152 = vpop.f32.mrb[0].mxu0
    %153 = vdwg.mxu0
    %v154 = vmax.f32 %v151, 0.0
    %v155 = vmul.f32 %v154, %v154
    %156 = vadd.xlane.f32.xlu0 %v155
    %v157 = vpop.xlane.xlu0 %156
    %v158 = vmax.f32 %v157, 1e-24
    %v159 = vrsqrt.pop %v158
    %v160 = vmul.f32 %v154, %v159
    %v161 = vld [vmem:[#allocation7] sm:$0xff]
    %v162 = vld [vmem:[#allocation7 + $0x8] sm:$0xff]
    %v163 = vld [vmem:[#allocation7 + $0x10] sm:$0xff]
    %v164 = vld [vmem:[#allocation7 + $0x18] sm:$0xff]
    %v165 = vld [vmem:[#allocation7 + $0x20] sm:$0xff]
    %v166 = vld [vmem:[#allocation7 + $0x28] sm:$0xff]
    %v167 = vld [vmem:[#allocation7 + $0x30] sm:$0xff]
    %v168 = vld [vmem:[#allocation7 + $0x38] sm:$0xff]
    %v169 = vld [vmem:[#allocation7 + $0x40] sm:$0xff]
    %v170 = vld [vmem:[#allocation7 + $0x48] sm:$0xff]
    %v171 = vld [vmem:[#allocation7 + $0x50] sm:$0xff]
    %v172 = vld [vmem:[#allocation7 + $0x58] sm:$0xff]
    %v173 = vld [vmem:[#allocation7 + $0x60] sm:$0xff]
    %v174 = vld [vmem:[#allocation7 + $0x68] sm:$0xff]
    %v175 = vld [vmem:[#allocation7 + $0x70] sm:$0xff]
    %v176 = vld [vmem:[#allocation7 + $0x78] sm:$0xff]
    %v177 = vld [vmem:[%s4] sm:$0x1]
    %v179 = vlaneseq
    %v180 = vshrl.u32 %v179, 7
    %v181 = vsub.s32 0, %v180
    %v182 = vrot.slane %v177, %v181
    %184 = vmatprep.subr.mxu0 0.0
    %185 = vmatpush1.msra.mxu0 %v161
    %186 = vmatprep.subr.mxu0 0.0
    %187 = vmatpush1.msra.mxu0 %v162
    %188 = vmatprep.subr.mxu0 0.0
    %189 = vmatpush1.msra.mxu0 %v163
    %190 = vmatprep.subr.mxu0 0.0
    %191 = vmatpush1.msra.mxu0 %v164
    %192 = vmatprep.subr.mxu0 0.0
    %193 = vmatpush1.msra.mxu0 %v165
    %194 = vmatprep.subr.mxu0 0.0
    %195 = vmatpush1.msra.mxu0 %v166
    %196 = vmatprep.subr.mxu0 0.0
    %197 = vmatpush1.msra.mxu0 %v167
    %198 = vmatprep.subr.mxu0 0.0
    %199 = vmatpush1.msra.mxu0 %v168
    %200 = vmatprep.subr.mxu0 0.0
    %201 = vmatpush1.msra.mxu0 %v169
    %202 = vmatprep.subr.mxu0 0.0
    %203 = vmatpush1.msra.mxu0 %v170
    %204 = vmatprep.subr.mxu0 0.0
    %205 = vmatpush1.msra.mxu0 %v171
    %206 = vmatprep.subr.mxu0 0.0
    %207 = vmatpush1.msra.mxu0 %v172
    %208 = vmatprep.subr.mxu0 0.0
    %209 = vmatpush1.msra.mxu0 %v173
    %210 = vmatprep.subr.mxu0 0.0
    %211 = vmatpush1.msra.mxu0 %v174
    %212 = vmatprep.subr.mxu0 0.0
    %213 = vmatpush1.msra.mxu0 %v175
    %214 = vmatprep.subr.mxu0 0.0
    %215 = vmatpush1.msra.mxu0 %v176
    %216 = vmatprep.subr.mxu0 0.0
    %217 = vmatpush1.msra.mxu0 0.0
    %218 = vmatprep.subr.mxu0 0.0
    %219 = vmatpush1.msra.mxu0 0.0
    %220 = vmatprep.subr.mxu0 0.0
    %221 = vmatpush1.msra.mxu0 0.0
    %222 = vmatprep.subr.mxu0 0.0
    %223 = vmatpush1.msra.mxu0 0.0
    %224 = vmatprep.subr.mxu0 0.0
    %225 = vmatpush1.msra.mxu0 0.0
    %226 = vmatprep.subr.mxu0 0.0
    %227 = vmatpush1.msra.mxu0 0.0
    %228 = vmatprep.subr.mxu0 0.0
    %229 = vmatpush1.msra.mxu0 0.0
    %230 = vmatprep.subr.mxu0 0.0
    %231 = vmatpush1.msra.mxu0 0.0
    %232 = vmatprep.subr.mxu0 0.0
    %233 = vmatpush1.msra.mxu0 0.0
    %234 = vmatprep.subr.mxu0 0.0
    %235 = vmatpush1.msra.mxu0 0.0
    %236 = vmatprep.subr.mxu0 0.0
    %237 = vmatpush1.msra.mxu0 0.0
    %238 = vmatprep.subr.mxu0 0.0
    %239 = vmatpush1.msra.mxu0 0.0
    %240 = vmatprep.subr.mxu0 0.0
    %241 = vmatpush1.msra.mxu0 0.0
    %242 = vmatprep.subr.mxu0 0.0
    %243 = vmatpush1.msra.mxu0 0.0
    %244 = vmatprep.subr.mxu0 0.0
    %245 = vmatpush1.msra.mxu0 0.0
    %246 = vmatprep.subr.mxu0 0.0
    %247 = vmatpush1.msra.mxu0 0.0
    %248 = vmatprep.mubr.f32.mxu0 0.0
    %249 = vmatmul.mubr.f32.gmra.mrb[0].mxu0 %v160
    %v250 = vpop.f32.mrb[0].mxu0
    %v251 = vadd.f32 %v182, %v250
    %v252 = vpop.f32.mrb[0].mxu0
    %253 = vdwg.mxu0
    %v254 = vmax.f32 %v251, 0.0
    %v255 = vmul.f32 %v254, %v254
    %256 = vadd.xlane.f32.xlu0 %v255
    %v257 = vpop.xlane.xlu0 %256
    %v258 = vmax.f32 %v257, 1e-24
    %v259 = vrsqrt.pop %v258
    %v260 = vmul.f32 %v254, %v259
    %261 = vst [vmem:[#allocation8] sm:$0xff] %v260
    // Predicated region
    $region34: #{tpu_custom_call.1} parent=1 // pred_check
      _
    $region35: #{tpu_custom_call.1} parent=1 // pred_check_branch
      %263 = sbr.rel (0) target = $region37
    $region36: #{tpu_custom_call.1} parent=1 // pred_region
      %s265 = ssub.s32 128, 128
      %266 = vsyncadd [#allocation4], %s265
      %s268 = sshll.u32 [#allocation8], 4
      %s269 = int_to_ptr.vmem [resolvable:$true] %s268
      %271 = dma.vmem_to_hbm [thread:$0]  %s269, 128, %s5, [#allocation4]
    $region37: #{tpu_custom_call.1} parent=1 // pred_fallthru
      _
    // Predicated region
    $region38: #{tpu_custom_call.1} parent=1 // pred_check
      _
    $region39: #{tpu_custom_call.1} parent=1 // pred_check_branch
      %273 = sbr.rel (0) target = $region41
    $region40: #{tpu_custom_call.1} parent=1 // pred_region
      %274 = dma.done [#allocation4], 128
    $region41: #{tpu_custom_call.1} parent=1 // pred_fallthru
      _
    %275 = vsyncpa [#allocation3], 1
    %276 = vsyncpa [#allocation6], 1
    %277 = vsyncpa [#allocation4], 1

</llo_original>
